<compile_context>
chip_gen: v7x
topology: tpu7x:2x2x1
jax: 0.10.0
libtpu: 0.0.40
codegen_flags: <defaults>
</compile_context>

<pallas_src>
import functools

import jax
import jax.numpy as jnp
from jax.experimental import pallas as pl
from jax.experimental.pallas import tpu as pltpu


def _round_up(x, m):
    return ((x + m - 1) // m) * m


# ---------------------------------------------------------------------------
# Pallas kernel: fused 3-matmul forward for one batch tile
# ---------------------------------------------------------------------------
def _fused_mlp_adv_kernel(
    x_ref,
    w1_ref, b1_ref,          # layer_1 with BN1 folded in
    w2_ref, b2_ref,          # layer_2 with BN2 folded in
    wf_ref, bf_ref,          # [layer_3(BN3 folded) | adv fc0] fused on h2
    whd_ref, bhd_ref,        # block-diagonal [layer_out | adv fc1] fused head
    out_ref,                 # lane-dense output slab [TB, SLAB]
    *, h2_dim, h3_dim, h_adv, pa_dim, slab,
):
    x = x_ref[...]

    # --- layer 1: Linear(+BN1 folded) -> ReLU ---
    h1 = jnp.dot(x, w1_ref[...], preferred_element_type=jnp.float32) + b1_ref[...]
    h1 = jnp.maximum(h1, 0.0)

    # --- layer 2: Linear(+BN2 folded) -> ReLU  (== 'hidden' / enc_x) ---
    h2 = jnp.dot(h1.astype(w2_ref.dtype), w2_ref[...],
                 preferred_element_type=jnp.float32) + b2_ref[...]
    h2 = jnp.maximum(h2, 0.0)

    # --- fused [layer_3(+BN3) | adv fc0] on h2, single ReLU on both halves ---
    hf = jnp.dot(h2.astype(wf_ref.dtype), wf_ref[...],
                 preferred_element_type=jnp.float32) + bf_ref[...]
    hf = jnp.maximum(hf, 0.0)            # [:, :h3_dim] = h3, [:, h3_dim:] = a1

    # --- fused block-diagonal heads: [h3 | a1] @ blkdiag(Wout, Wa2) = [pred | adv] ---
    pa = jnp.dot(hf.astype(whd_ref.dtype), whd_ref[...],
                 preferred_element_type=jnp.float32) + bhd_ref[...]

    a1 = hf[:, h3_dim:]

    # --- pack everything into one lane-dense slab ---
    out_ref[:, 0:h2_dim] = h2.astype(out_ref.dtype)
    out_ref[:, h2_dim:h2_dim + h_adv] = a1.astype(out_ref.dtype)
    out_ref[:, h2_dim + h_adv:h2_dim + h_adv + pa_dim] = pa.astype(out_ref.dtype)
    pad = slab - (h2_dim + h_adv + pa_dim)
    if pad:
        out_ref[:, slab - pad:] = jnp.zeros((out_ref.shape[0], pad), out_ref.dtype)


# ---------------------------------------------------------------------------
# Wrapper
# ---------------------------------------------------------------------------
def simple_nonlinear_adv_forward(x, p, *, block_b=512, param_dtype=jnp.float32):
    """x: [B, input_dim]. p: dict of parameters (see init_params).

    param_dtype=jnp.bfloat16 halves HBM traffic for x / weights on v6e / v7x
    (accumulation stays f32); default f32 matches the PyTorch module exactly.
    """
    B, input_dim = x.shape
    eps = 1e-5

    h1_dim = p["w1"].shape[1]       # 128
    h2_dim = p["w2"].shape[1]       # 64
    h3_dim = p["w3"].shape[1]       # 32
    d_out = p["wo"].shape[1]
    h_adv = p["aw1"].shape[1]
    d_adv = p["aw2"].shape[1]
    pa_dim = d_out + d_adv
    total = h2_dim + h_adv + pa_dim
    slab = max(128, _round_up(total, 128))   # lane-dense output slab width

    # ---- fold eval-mode BatchNorm1d into the preceding Linear (wrapper glue) ----
    def bn_scale_shift(g, b, m, v):
        s = g / jnp.sqrt(v + eps)
        return s, b - m * s

    s1, t1 = bn_scale_shift(p["bn1_g"], p["bn1_b"], p["bn1_m"], p["bn1_v"])
    s2, t2 = bn_scale_shift(p["bn2_g"], p["bn2_b"], p["bn2_m"], p["bn2_v"])
    s3, t3 = bn_scale_shift(p["bn3_g"], p["bn3_b"], p["bn3_m"], p["bn3_v"])

    w1f = (p["w1"] * s1[None, :]).astype(param_dtype)
    b1f = (p["b1"] * s1 + t1)[None, :].astype(jnp.float32)
    w2f = (p["w2"] * s2[None, :]).astype(param_dtype)
    b2f = (p["b2"] * s2 + t2)[None, :].astype(jnp.float32)
    w3f = p["w3"] * s3[None, :]
    b3f = p["b3"] * s3 + t3

    # ---- fuse layer_3 and adv fc0 (both consume h2, both followed by ReLU) ----
    wf = jnp.concatenate([w3f, p["aw1"]], axis=1).astype(param_dtype)     # [h2, h3+h_adv]
    bf = jnp.concatenate([b3f, p["ab1"]], axis=0)[None, :].astype(jnp.float32)

    # ---- fuse the two output heads block-diagonally: [h3|a1] @ Whd = [pred|adv] ----
    whd = jnp.zeros((h3_dim + h_adv, pa_dim), jnp.float32)
    whd = whd.at[:h3_dim, :d_out].set(p["wo"])
    whd = whd.at[h3_dim:, d_out:].set(p["aw2"])
    whd = whd.astype(param_dtype)
    bhd = jnp.concatenate([p["bo"], p["ab2"]], axis=0)[None, :].astype(jnp.float32)

    # ---- batch tiling ----
    x_in = x.astype(param_dtype)
    tb = min(block_b, _round_up(B, 8))
    b_pad = _round_up(B, tb)
    if b_pad != B:
        x_in = jnp.pad(x_in, ((0, b_pad - B), (0, 0)))
    grid = (b_pad // tb,)

    operands = (x_in, w1f, b1f, w2f, b2f, wf, bf, whd, bhd)

    def const_spec(a):
        nd = a.ndim
        return pl.BlockSpec(a.shape, lambda i, _nd=nd: (0,) * _nd)

    in_specs = [pl.BlockSpec((tb, input_dim), lambda i: (i, 0))] + [
        const_spec(a) for a in operands[1:]
    ]
    out_spec = pl.BlockSpec((tb, slab), lambda i: (i, 0))
    out_shape = jax.ShapeDtypeStruct((b_pad, slab), jnp.float32)

    flops = 2 * b_pad * (
        input_dim * h1_dim
        + h1_dim * h2_dim
        + h2_dim * (h3_dim + h_adv)
        + (h3_dim + h_adv) * pa_dim
    )
    bytes_accessed = int(
        sum(int(a.size) * a.dtype.itemsize for a in operands) + b_pad * slab * 4
    )

    kernel = functools.partial(
        _fused_mlp_adv_kernel,
        h2_dim=h2_dim, h3_dim=h3_dim, h_adv=h_adv, pa_dim=pa_dim, slab=slab,
    )

    slab_out = pl.pallas_call(
        kernel,
        grid=grid,
        in_specs=in_specs,
        out_specs=out_spec,
        out_shape=out_shape,
        compiler_params=pltpu.CompilerParams(
            dimension_semantics=("parallel",),   # shards batch tiles across TCs on v7x
        ),
        cost_estimate=pl.CostEstimate(
            flops=flops, transcendentals=0, bytes_accessed=bytes_accessed
        ),
    )(*operands)

    # ---- slice the lane-dense slab apart (wrapper glue) ----
    hidden = slab_out[:B, 0:h2_dim]
    a1 = slab_out[:B, h2_dim:h2_dim + h_adv]
    pred = slab_out[:B, h2_dim + h_adv:h2_dim + h_adv + d_out]
    adv = slab_out[:B, h2_dim + h_adv + d_out:h2_dim + h_adv + pa_dim]

    return {
        "prediction": pred,
        "adv_output": adv,
        "hidden": hidden,
        "classifier_hiddens": None,
        "adv_hiddens": [a1, adv],
    }


# ---------------------------------------------------------------------------
# Deterministic parameter initialization (synthetic; shapes from __init__)
# ---------------------------------------------------------------------------
def init_params(key, input_dim, output_dim, adv_hidden, adv_output):
    ks = list(jax.random.split(key, 8))

    def xavier(k, fan_in, fan_out):
        lim = (6.0 / (fan_in + fan_out)) ** 0.5
        return jax.random.uniform(k, (fan_in, fan_out), jnp.float32, -lim, lim)

    p = {}
    # encoder linears (weights stored [in, out])
    p["w1"] = xavier(ks[0], input_dim, 128); p["b1"] = jnp.zeros((128,), jnp.float32)
    p["w2"] = xavier(ks[1], 128, 64);        p["b2"] = jnp.zeros((64,), jnp.float32)
    p["w3"] = xavier(ks[2], 64, 32);         p["b3"] = jnp.zeros((32,), jnp.float32)
    p["wo"] = xavier(ks[3], 32, output_dim); p["bo"] = jnp.zeros((output_dim,), jnp.float32)

    # batchnorm params (fresh torch init, eval mode)
    for name, dim in (("bn1", 128), ("bn2", 64), ("bn3", 32)):
        p[f"{name}_g"] = jnp.ones((dim,), jnp.float32)
        p[f"{name}_b"] = jnp.zeros((dim,), jnp.float32)
        p[f"{name}_m"] = jnp.zeros((dim,), jnp.float32)
        p[f"{name}_v"] = jnp.ones((dim,), jnp.float32)

    # adversary: Linear(64 -> adv_hidden) ; Linear(adv_hidden -> adv_output)
    p["aw1"] = xavier(ks[4], 64, adv_hidden)
    p["ab1"] = jnp.zeros((adv_hidden,), jnp.float32)
    p["aw2"] = xavier(ks[5], adv_hidden, adv_output)
    p["ab2"] = jnp.zeros((adv_output,), jnp.float32)
    return p


# ---------------------------------------------------------------------------
# Pure-JAX reference (for verification)
# ---------------------------------------------------------------------------
def reference_forward(x, p):
    eps = 1e-5

    def bn(h, g, b, m, v):
        return g * (h - m) / jnp.sqrt(v + eps) + b

    h1 = jnp.maximum(bn(x @ p["w1"] + p["b1"], p["bn1_g"], p["bn1_b"], p["bn1_m"], p["bn1_v"]), 0)
    h2 = jnp.maximum(bn(h1 @ p["w2"] + p["b2"], p["bn2_g"], p["bn2_b"], p["bn2_m"], p["bn2_v"]), 0)
    h3 = jnp.maximum(bn(h2 @ p["w3"] + p["b3"], p["bn3_g"], p["bn3_b"], p["bn3_m"], p["bn3_v"]), 0)
    pred = h3 @ p["wo"] + p["bo"]
    a1 = jnp.maximum(h2 @ p["aw1"] + p["ab1"], 0)
    adv = a1 @ p["aw2"] + p["ab2"]
    return pred, adv, h2, a1


if __name__ == "__main__":
    # Small deterministic example shapes consistent with the module.
    B, INPUT_DIM, OUTPUT_DIM = 8, 32, 8
    ADV_HIDDEN, ADV_OUTPUT = 32, 4     # adv Linear: number_of_layers=2, input_dim=64

    key = jax.random.PRNGKey(0)
    kx, kp = jax.random.split(key)
    x = jax.random.normal(kx, (B, INPUT_DIM), jnp.float32)
    params = init_params(kp, INPUT_DIM, OUTPUT_DIM, ADV_HIDDEN, ADV_OUTPUT)

    out = simple_nonlinear_adv_forward(x, params)
    jax.block_until_ready(out["prediction"])
    jax.block_until_ready(out["adv_output"])

    # verify against pure-JAX reference
    ref_pred, ref_adv, ref_hid, ref_a1 = reference_forward(x, params)
    assert jnp.allclose(out["prediction"], ref_pred, atol=1e-4, rtol=1e-4)
    assert jnp.allclose(out["adv_output"], ref_adv, atol=1e-4, rtol=1e-4)
    assert jnp.allclose(out["hidden"], ref_hid, atol=1e-4, rtol=1e-4)
    assert jnp.allclose(out["adv_hiddens"][0], ref_a1, atol=1e-4, rtol=1e-4)

    print("KERNEL_OK")
</pallas_src>

<mosaic_0001>
module attributes {stable_mosaic.version = 11 : i64} {
  func.func @_fused_mlp_adv_kernel(%arg0: i32, %arg1: memref<8x32xf32, #tpu.memory_space<vmem>>, %arg2: memref<32x128xf32, #tpu.memory_space<vmem>>, %arg3: memref<1x128xf32, #tpu.memory_space<vmem>>, %arg4: memref<128x64xf32, #tpu.memory_space<vmem>>, %arg5: memref<1x64xf32, #tpu.memory_space<vmem>>, %arg6: memref<64x64xf32, #tpu.memory_space<vmem>>, %arg7: memref<1x64xf32, #tpu.memory_space<vmem>>, %arg8: memref<64x12xf32, #tpu.memory_space<vmem>>, %arg9: memref<1x12xf32, #tpu.memory_space<vmem>>, %arg10: memref<8x128xf32, #tpu.memory_space<vmem>>) attributes {dimension_semantics = [#tpu.dimension_semantics<parallel>], iteration_bounds = array<i64: 1>, scalar_prefetch = 0 : i64, scratch_operands = 0 : i64, tpu.core_type = #tpu.core_type<tc>, window_params = [{transform_indices = @transform_0, window_bounds = array<i64: 8, 32>}, {pipeline_mode = #tpu.pipeline_mode<synchronous>, transform_indices = @transform_1, window_bounds = array<i64: 32, 128>}, {pipeline_mode = #tpu.pipeline_mode<synchronous>, transform_indices = @transform_2, window_bounds = array<i64: 1, 128>}, {pipeline_mode = #tpu.pipeline_mode<synchronous>, transform_indices = @transform_3, window_bounds = array<i64: 128, 64>}, {pipeline_mode = #tpu.pipeline_mode<synchronous>, transform_indices = @transform_4, window_bounds = array<i64: 1, 64>}, {pipeline_mode = #tpu.pipeline_mode<synchronous>, transform_indices = @transform_5, window_bounds = array<i64: 64, 64>}, {pipeline_mode = #tpu.pipeline_mode<synchronous>, transform_indices = @transform_6, window_bounds = array<i64: 1, 64>}, {pipeline_mode = #tpu.pipeline_mode<synchronous>, transform_indices = @transform_7, window_bounds = array<i64: 64, 12>}, {pipeline_mode = #tpu.pipeline_mode<synchronous>, transform_indices = @transform_8, window_bounds = array<i64: 1, 12>}, {transform_indices = @transform_9, window_bounds = array<i64: 8, 128>}]} {
    %c0 = arith.constant 0 : index
    %c0_0 = arith.constant 0 : index
    %0 = vector.load %arg1[%c0, %c0_0] : memref<8x32xf32, #tpu.memory_space<vmem>>, vector<8x32xf32>
    %c0_1 = arith.constant 0 : index
    %c0_2 = arith.constant 0 : index
    %1 = vector.load %arg2[%c0_1, %c0_2] : memref<32x128xf32, #tpu.memory_space<vmem>>, vector<32x128xf32>
    %cst = arith.constant dense<0.000000e+00> : vector<8x128xf32>
    %2 = tpu.matmul %0, %1, %cst {dimension_numbers = #tpu.dot_dimension_numbers<[1], [0], [0], [1], [0, 0, 1, 1], [], []>} : vector<8x32xf32>, vector<32x128xf32>, vector<8x128xf32> -> vector<8x128xf32>
    %c0_3 = arith.constant 0 : index
    %c0_4 = arith.constant 0 : index
    %3 = vector.load %arg3[%c0_3, %c0_4] : memref<1x128xf32, #tpu.memory_space<vmem>>, vector<1x128xf32>
    %4 = vector.broadcast %3 : vector<1x128xf32> to vector<8x128xf32>
    %5 = arith.addf %2, %4 : vector<8x128xf32>
    %cst_5 = arith.constant 0.000000e+00 : f32
    %6 = vector.broadcast %cst_5 : f32 to vector<8x128xf32>
    %7 = arith.maximumf %5, %6 : vector<8x128xf32>
    %c0_6 = arith.constant 0 : index
    %c0_7 = arith.constant 0 : index
    %8 = vector.load %arg4[%c0_6, %c0_7] : memref<128x64xf32, #tpu.memory_space<vmem>>, vector<128x64xf32>
    %cst_8 = arith.constant dense<0.000000e+00> : vector<8x64xf32>
    %9 = tpu.matmul %7, %8, %cst_8 {dimension_numbers = #tpu.dot_dimension_numbers<[1], [0], [0], [1], [0, 0, 1, 1], [], []>} : vector<8x128xf32>, vector<128x64xf32>, vector<8x64xf32> -> vector<8x64xf32>
    %c0_9 = arith.constant 0 : index
    %c0_10 = arith.constant 0 : index
    %10 = vector.load %arg5[%c0_9, %c0_10] : memref<1x64xf32, #tpu.memory_space<vmem>>, vector<1x64xf32>
    %11 = vector.broadcast %10 : vector<1x64xf32> to vector<8x64xf32>
    %12 = arith.addf %9, %11 : vector<8x64xf32>
    %cst_11 = arith.constant 0.000000e+00 : f32
    %13 = vector.broadcast %cst_11 : f32 to vector<8x64xf32>
    %14 = arith.maximumf %12, %13 : vector<8x64xf32>
    %c0_12 = arith.constant 0 : index
    %c0_13 = arith.constant 0 : index
    %15 = vector.load %arg6[%c0_12, %c0_13] : memref<64x64xf32, #tpu.memory_space<vmem>>, vector<64x64xf32>
    %cst_14 = arith.constant dense<0.000000e+00> : vector<8x64xf32>
    %16 = tpu.matmul %14, %15, %cst_14 {dimension_numbers = #tpu.dot_dimension_numbers<[1], [0], [0], [1], [0, 0, 1, 1], [], []>} : vector<8x64xf32>, vector<64x64xf32>, vector<8x64xf32> -> vector<8x64xf32>
    %c0_15 = arith.constant 0 : index
    %c0_16 = arith.constant 0 : index
    %17 = vector.load %arg7[%c0_15, %c0_16] : memref<1x64xf32, #tpu.memory_space<vmem>>, vector<1x64xf32>
    %18 = vector.broadcast %17 : vector<1x64xf32> to vector<8x64xf32>
    %19 = arith.addf %16, %18 : vector<8x64xf32>
    %cst_17 = arith.constant 0.000000e+00 : f32
    %20 = vector.broadcast %cst_17 : f32 to vector<8x64xf32>
    %21 = arith.maximumf %19, %20 : vector<8x64xf32>
    %c0_18 = arith.constant 0 : index
    %c0_19 = arith.constant 0 : index
    %22 = vector.load %arg8[%c0_18, %c0_19] : memref<64x12xf32, #tpu.memory_space<vmem>>, vector<64x12xf32>
    %cst_20 = arith.constant dense<0.000000e+00> : vector<8x12xf32>
    %23 = tpu.matmul %21, %22, %cst_20 {dimension_numbers = #tpu.dot_dimension_numbers<[1], [0], [0], [1], [0, 0, 1, 1], [], []>} : vector<8x64xf32>, vector<64x12xf32>, vector<8x12xf32> -> vector<8x12xf32>
    %c0_21 = arith.constant 0 : index
    %c0_22 = arith.constant 0 : index
    %24 = vector.load %arg9[%c0_21, %c0_22] : memref<1x12xf32, #tpu.memory_space<vmem>>, vector<1x12xf32>
    %25 = vector.broadcast %24 : vector<1x12xf32> to vector<8x12xf32>
    %26 = arith.addf %23, %25 : vector<8x12xf32>
    %27 = vector.extract_strided_slice %21 {offsets = [0, 32], sizes = [8, 32], strides = [1, 1]} : vector<8x64xf32> to vector<8x32xf32>
    %c0_23 = arith.constant 0 : index
    %c0_24 = arith.constant 0 : index
    %28 = vector.load %arg10[%c0_23, %c0_24] : memref<8x128xf32, #tpu.memory_space<vmem>>, vector<8x64xf32>
    tpu.vector_store %arg10[%c0_23, %c0_24], %14 {strides = array<i32>} : memref<8x128xf32, #tpu.memory_space<vmem>>, vector<8x64xf32>,
    %c0_25 = arith.constant 0 : index
    %c64 = arith.constant 64 : index
    %29 = vector.load %arg10[%c0_25, %c64] : memref<8x128xf32, #tpu.memory_space<vmem>>, vector<8x32xf32>
    tpu.vector_store %arg10[%c0_25, %c64], %27 {strides = array<i32>} : memref<8x128xf32, #tpu.memory_space<vmem>>, vector<8x32xf32>,
    %c0_26 = arith.constant 0 : index
    %c96 = arith.constant 96 : index
    %30 = vector.load %arg10[%c0_26, %c96] : memref<8x128xf32, #tpu.memory_space<vmem>>, vector<8x12xf32>
    tpu.vector_store %arg10[%c0_26, %c96], %26 {strides = array<i32>} : memref<8x128xf32, #tpu.memory_space<vmem>>, vector<8x12xf32>,
    %cst_27 = arith.constant 0.000000e+00 : f32
    %31 = vector.broadcast %cst_27 : f32 to vector<8x20xf32>
    %c0_28 = arith.constant 0 : index
    %c108 = arith.constant 108 : index
    %32 = vector.load %arg10[%c0_28, %c108] : memref<8x128xf32, #tpu.memory_space<vmem>>, vector<8x20xf32>
    tpu.vector_store %arg10[%c0_28, %c108], %31 {strides = array<i32>} : memref<8x128xf32, #tpu.memory_space<vmem>>, vector<8x20xf32>,
    return
  }
  func.func @transform_0(%arg0: i32) -> (i32, i32) {
    %c0_i32 = arith.constant 0 : i32
    %c0_i32_0 = arith.constant 0 : i32
    return %arg0, %c0_i32 : i32, i32
  }
  func.func @transform_1(%arg0: i32) -> (i32, i32) {
    %c0_i32 = arith.constant 0 : i32
    %c0_i32_0 = arith.constant 0 : i32
    %c0_i32_1 = arith.constant 0 : i32
    return %c0_i32, %c0_i32_0 : i32, i32
  }
  func.func @transform_2(%arg0: i32) -> (i32, i32) {
    %c0_i32 = arith.constant 0 : i32
    %c0_i32_0 = arith.constant 0 : i32
    %c0_i32_1 = arith.constant 0 : i32
    return %c0_i32, %c0_i32_0 : i32, i32
  }
  func.func @transform_3(%arg0: i32) -> (i32, i32) {
    %c0_i32 = arith.constant 0 : i32
    %c0_i32_0 = arith.constant 0 : i32
    %c0_i32_1 = arith.constant 0 : i32
    return %c0_i32, %c0_i32_0 : i32, i32
  }
  func.func @transform_4(%arg0: i32) -> (i32, i32) {
    %c0_i32 = arith.constant 0 : i32
    %c0_i32_0 = arith.constant 0 : i32
    %c0_i32_1 = arith.constant 0 : i32
    return %c0_i32, %c0_i32_0 : i32, i32
  }
  func.func @transform_5(%arg0: i32) -> (i32, i32) {
    %c0_i32 = arith.constant 0 : i32
    %c0_i32_0 = arith.constant 0 : i32
    %c0_i32_1 = arith.constant 0 : i32
    return %c0_i32, %c0_i32_0 : i32, i32
  }
  func.func @transform_6(%arg0: i32) -> (i32, i32) {
    %c0_i32 = arith.constant 0 : i32
    %c0_i32_0 = arith.constant 0 : i32
    %c0_i32_1 = arith.constant 0 : i32
    return %c0_i32, %c0_i32_0 : i32, i32
  }
  func.func @transform_7(%arg0: i32) -> (i32, i32) {
    %c0_i32 = arith.constant 0 : i32
    %c0_i32_0 = arith.constant 0 : i32
    %c0_i32_1 = arith.constant 0 : i32
    return %c0_i32, %c0_i32_0 : i32, i32
  }
  func.func @transform_8(%arg0: i32) -> (i32, i32) {
    %c0_i32 = arith.constant 0 : i32
    %c0_i32_0 = arith.constant 0 : i32
    %c0_i32_1 = arith.constant 0 : i32
    return %c0_i32, %c0_i32_0 : i32, i32
  }
  func.func @transform_9(%arg0: i32) -> (i32, i32) {
    %c0_i32 = arith.constant 0 : i32
    %c0_i32_0 = arith.constant 0 : i32
    return %arg0, %c0_i32 : i32, i32
  }
}

</mosaic_0001>

<llo_original>
// kernel: tpu_custom_call.1
$region0: #{tpu_custom_call.1}
  #allocation0 [shape = 'u32[]', space=smem, size = 0x4, offset = 0x4, fixed_abs, tag = 'smem constant byte address 0x4 - core index']
  #allocation1 [shape = 'u32[144,128]{1,0:T(1,128)}', space=vmem, size = 0x12000, scoped, tag = 'internal scratch']
  %s0 = inlined_call_operand.vmem [shape: f32[8,32], index: 0, kind: input, shape index: {}]
  %s1 = inlined_call_operand.vmem [shape: f32[32,128], index: 1, kind: input, shape index: {}]
  %s2 = inlined_call_operand.vmem [shape: f32[1,128], index: 2, kind: input, shape index: {}]
  %s3 = inlined_call_operand.vmem [shape: f32[128,64], index: 3, kind: input, shape index: {}]
  %s4 = inlined_call_operand.vmem [shape: f32[1,64], index: 4, kind: input, shape index: {}]
  %s5 = inlined_call_operand.vmem [shape: f32[64,64], index: 5, kind: input, shape index: {}]
  %s6 = inlined_call_operand.vmem [shape: f32[1,64], index: 6, kind: input, shape index: {}]
  %s7 = inlined_call_operand.vmem [shape: f32[64,12], index: 7, kind: input, shape index: {}]
  %s8 = inlined_call_operand.vmem [shape: f32[1,12], index: 8, kind: input, shape index: {}]
  %s9 = inlined_call_operand.hbm [shape: f32[8,128], index: 9, kind: output, shape index: {}]
  %s10 = sld [smem:[#allocation0]]
  $region46: #{tpu_custom_call.1} parent=0
    _
  %s12 = ssub.s32 1, %s10
  %s13 = scalar_select 0, %s12, %s10
  $region1: #{tpu_custom_call.1} parent=0
    #allocation2 [shape = 'u8[4096]{0}', space=vmem, size = 0x1000, scoped, tag = 'output window, operand 0, single buffered']
    #allocation3 [shape = 's32[1]{0}', space=sflag, size = 0x4, scoped, tag = 'scoped memory for tpu_custom_call.1']
    %14 = vsyncpa [#allocation3], 0
    // Predicated region
    $region2: #{tpu_custom_call.1} parent=1 // pred_check
      _
    $region3: #{tpu_custom_call.1} parent=1 // pred_check_branch
      %16 = sbr.rel (0) target = $region5
    $region4: #{tpu_custom_call.1} parent=1 // pred_region
      _
    $region5: #{tpu_custom_call.1} parent=1 // pred_fallthru
      _
    // Predicated region
    $region6: #{tpu_custom_call.1} parent=1 // pred_check
      _
    $region7: #{tpu_custom_call.1} parent=1 // pred_check_branch
      %18 = sbr.rel (0) target = $region9
    $region8: #{tpu_custom_call.1} parent=1 // pred_region
      _
    $region9: #{tpu_custom_call.1} parent=1 // pred_fallthru
      _
    // Predicated region
    $region10: #{tpu_custom_call.1} parent=1 // pred_check
      _
    $region11: #{tpu_custom_call.1} parent=1 // pred_check_branch
      %20 = sbr.rel (0) target = $region13
    $region12: #{tpu_custom_call.1} parent=1 // pred_region
      _
    $region13: #{tpu_custom_call.1} parent=1 // pred_fallthru
      _
    // Predicated region
    $region14: #{tpu_custom_call.1} parent=1 // pred_check
      _
    $region15: #{tpu_custom_call.1} parent=1 // pred_check_branch
      %22 = sbr.rel (0) target = $region17
    $region16: #{tpu_custom_call.1} parent=1 // pred_region
      _
    $region17: #{tpu_custom_call.1} parent=1 // pred_fallthru
      _
    // Predicated region
    $region18: #{tpu_custom_call.1} parent=1 // pred_check
      _
    $region19: #{tpu_custom_call.1} parent=1 // pred_check_branch
      %24 = sbr.rel (0) target = $region21
    $region20: #{tpu_custom_call.1} parent=1 // pred_region
      _
    $region21: #{tpu_custom_call.1} parent=1 // pred_fallthru
      _
    // Predicated region
    $region22: #{tpu_custom_call.1} parent=1 // pred_check
      _
    $region23: #{tpu_custom_call.1} parent=1 // pred_check_branch
      %26 = sbr.rel (0) target = $region25
    $region24: #{tpu_custom_call.1} parent=1 // pred_region
      _
    $region25: #{tpu_custom_call.1} parent=1 // pred_fallthru
      _
    // Predicated region
    $region26: #{tpu_custom_call.1} parent=1 // pred_check
      _
    $region27: #{tpu_custom_call.1} parent=1 // pred_check_branch
      %28 = sbr.rel (0) target = $region29
    $region28: #{tpu_custom_call.1} parent=1 // pred_region
      _
    $region29: #{tpu_custom_call.1} parent=1 // pred_fallthru
      _
    // Predicated region
    $region30: #{tpu_custom_call.1} parent=1 // pred_check
      _
    $region31: #{tpu_custom_call.1} parent=1 // pred_check_branch
      %30 = sbr.rel (0) target = $region33
    $region32: #{tpu_custom_call.1} parent=1 // pred_region
      _
    $region33: #{tpu_custom_call.1} parent=1 // pred_fallthru
      _
    // Predicated region
    $region34: #{tpu_custom_call.1} parent=1 // pred_check
      _
    $region35: #{tpu_custom_call.1} parent=1 // pred_check_branch
      %32 = sbr.rel (0) target = $region37
    $region36: #{tpu_custom_call.1} parent=1 // pred_region
      _
    $region37: #{tpu_custom_call.1} parent=1 // pred_fallthru
      _
    %v33 = vld [vmem:[%s0] sm:$0xff]
    %v34 = vld [vmem:[%s1] sm:$0xff]
    %v35 = vld [vmem:[%s1 + $0x8] sm:$0xff]
    %v36 = vld [vmem:[%s1 + $0x10] sm:$0xff]
    %v37 = vld [vmem:[%s1 + $0x18] sm:$0xff]
    %v38 = vld [vmem:[%s2] sm:$0x1]
    %v40 = vlaneseq
    %v41 = vshrl.u32 %v40, 7
    %v42 = vsub.s32 0, %v41
    %v43 = vrot.slane %v38, %v42
    %vm45 = vcmask 261120
    %v47 = vsel %vm45, %v33, 0
    %49 = vmatprep.subr.mxu0 0.0
    %50 = vmatpush1.msra.mxu0 %v34
    %51 = vmatprep.subr.mxu0 0.0
    %52 = vmatpush1.msra.mxu0 %v35
    %53 = vmatprep.subr.mxu0 0.0
    %54 = vmatpush1.msra.mxu0 %v36
    %55 = vmatprep.subr.mxu0 0.0
    %56 = vmatpush1.msra.mxu0 %v37
    %57 = vmatprep.subr.mxu0 0.0
    %58 = vmatpush1.msra.mxu0 0.0
    %59 = vmatprep.subr.mxu0 0.0
    %60 = vmatpush1.msra.mxu0 0.0
    %61 = vmatprep.subr.mxu0 0.0
    %62 = vmatpush1.msra.mxu0 0.0
    %63 = vmatprep.subr.mxu0 0.0
    %64 = vmatpush1.msra.mxu0 0.0
    %65 = vmatprep.subr.mxu0 0.0
    %66 = vmatpush1.msra.mxu0 0.0
    %67 = vmatprep.subr.mxu0 0.0
    %68 = vmatpush1.msra.mxu0 0.0
    %69 = vmatprep.subr.mxu0 0.0
    %70 = vmatpush1.msra.mxu0 0.0
    %71 = vmatprep.subr.mxu0 0.0
    %72 = vmatpush1.msra.mxu0 0.0
    %73 = vmatprep.subr.mxu0 0.0
    %74 = vmatpush1.msra.mxu0 0.0
    %75 = vmatprep.subr.mxu0 0.0
    %76 = vmatpush1.msra.mxu0 0.0
    %77 = vmatprep.subr.mxu0 0.0
    %78 = vmatpush1.msra.mxu0 0.0
    %79 = vmatprep.subr.mxu0 0.0
    %80 = vmatpush1.msra.mxu0 0.0
    %81 = vmatprep.subr.mxu0 0.0
    %82 = vmatpush1.msra.mxu0 0.0
    %83 = vmatprep.subr.mxu0 0.0
    %84 = vmatpush1.msra.mxu0 0.0
    %85 = vmatprep.subr.mxu0 0.0
    %86 = vmatpush1.msra.mxu0 0.0
    %87 = vmatprep.subr.mxu0 0.0
    %88 = vmatpush1.msra.mxu0 0.0
    %89 = vmatprep.subr.mxu0 0.0
    %90 = vmatpush1.msra.mxu0 0.0
    %91 = vmatprep.subr.mxu0 0.0
    %92 = vmatpush1.msra.mxu0 0.0
    %93 = vmatprep.subr.mxu0 0.0
    %94 = vmatpush1.msra.mxu0 0.0
    %95 = vmatprep.subr.mxu0 0.0
    %96 = vmatpush1.msra.mxu0 0.0
    %97 = vmatprep.subr.mxu0 0.0
    %98 = vmatpush1.msra.mxu0 0.0
    %99 = vmatprep.subr.mxu0 0.0
    %100 = vmatpush1.msra.mxu0 0.0
    %101 = vmatprep.subr.mxu0 0.0
    %102 = vmatpush1.msra.mxu0 0.0
    %103 = vmatprep.subr.mxu0 0.0
    %104 = vmatpush1.msra.mxu0 0.0
    %105 = vmatprep.subr.mxu0 0.0
    %106 = vmatpush1.msra.mxu0 0.0
    %107 = vmatprep.subr.mxu0 0.0
    %108 = vmatpush1.msra.mxu0 0.0
    %109 = vmatprep.subr.mxu0 0.0
    %110 = vmatpush1.msra.mxu0 0.0
    %111 = vmatprep.subr.mxu0 0.0
    %112 = vmatpush1.msra.mxu0 0.0
    %113 = vmatprep.mubr.f32.mxu0 0.0
    %114 = vmatmul.mubr.f32.gmra.mrb[0].mxu0 %v47
    %v115 = vpop.f32.mrb[0].mxu0
    %v116 = vadd.f32 %v43, %v115
    %v117 = vpop.f32.mrb[0].mxu0
    %118 = vdwg.mxu0
    %v119 = vmax.f32 %v116, 0.0
    %v120 = vld [vmem:[%s3] sm:$0xff]
    %v121 = vld [vmem:[%s3 + $0x8] sm:$0xff]
    %v122 = vld [vmem:[%s3 + $0x10] sm:$0xff]
    %v123 = vld [vmem:[%s3 + $0x18] sm:$0xff]
    %v124 = vld [vmem:[%s3 + $0x20] sm:$0xff]
    %v125 = vld [vmem:[%s3 + $0x28] sm:$0xff]
    %v126 = vld [vmem:[%s3 + $0x30] sm:$0xff]
    %v127 = vld [vmem:[%s3 + $0x38] sm:$0xff]
    %v128 = vld [vmem:[%s3 + $0x40] sm:$0xff]
    %v129 = vld [vmem:[%s3 + $0x48] sm:$0xff]
    %v130 = vld [vmem:[%s3 + $0x50] sm:$0xff]
    %v131 = vld [vmem:[%s3 + $0x58] sm:$0xff]
    %v132 = vld [vmem:[%s3 + $0x60] sm:$0xff]
    %v133 = vld [vmem:[%s3 + $0x68] sm:$0xff]
    %v134 = vld [vmem:[%s3 + $0x70] sm:$0xff]
    %v135 = vld [vmem:[%s3 + $0x78] sm:$0xff]
    %v136 = vld [vmem:[%s4] sm:$0x1]
    %v138 = vlaneseq
    %v139 = vshrl.u32 %v138, 7
    %v140 = vsub.s32 0, %v139
    %v141 = vrot.slane %v136, %v140
    %143 = vmatprep.subr.mxu0 0.0
    %144 = vmatpush1.msra.mxu0 %v120
    %145 = vmatprep.subr.mxu0 0.0
    %146 = vmatpush1.msra.mxu0 %v121
    %147 = vmatprep.subr.mxu0 0.0
    %148 = vmatpush1.msra.mxu0 %v122
    %149 = vmatprep.subr.mxu0 0.0
    %150 = vmatpush1.msra.mxu0 %v123
    %151 = vmatprep.subr.mxu0 0.0
    %152 = vmatpush1.msra.mxu0 %v124
    %153 = vmatprep.subr.mxu0 0.0
    %154 = vmatpush1.msra.mxu0 %v125
    %155 = vmatprep.subr.mxu0 0.0
    %156 = vmatpush1.msra.mxu0 %v126
    %157 = vmatprep.subr.mxu0 0.0
    %158 = vmatpush1.msra.mxu0 %v127
    %159 = vmatprep.subr.mxu0 0.0
    %160 = vmatpush1.msra.mxu0 %v128
    %161 = vmatprep.subr.mxu0 0.0
    %162 = vmatpush1.msra.mxu0 %v129
    %163 = vmatprep.subr.mxu0 0.0
    %164 = vmatpush1.msra.mxu0 %v130
    %165 = vmatprep.subr.mxu0 0.0
    %166 = vmatpush1.msra.mxu0 %v131
    %167 = vmatprep.subr.mxu0 0.0
    %168 = vmatpush1.msra.mxu0 %v132
    %169 = vmatprep.subr.mxu0 0.0
    %170 = vmatpush1.msra.mxu0 %v133
    %171 = vmatprep.subr.mxu0 0.0
    %172 = vmatpush1.msra.mxu0 %v134
    %173 = vmatprep.subr.mxu0 0.0
    %174 = vmatpush1.msra.mxu0 %v135
    %175 = vmatprep.subr.mxu0 0.0
    %176 = vmatpush1.msra.mxu0 0.0
    %177 = vmatprep.subr.mxu0 0.0
    %178 = vmatpush1.msra.mxu0 0.0
    %179 = vmatprep.subr.mxu0 0.0
    %180 = vmatpush1.msra.mxu0 0.0
    %181 = vmatprep.subr.mxu0 0.0
    %182 = vmatpush1.msra.mxu0 0.0
    %183 = vmatprep.subr.mxu0 0.0
    %184 = vmatpush1.msra.mxu0 0.0
    %185 = vmatprep.subr.mxu0 0.0
    %186 = vmatpush1.msra.mxu0 0.0
    %187 = vmatprep.subr.mxu0 0.0
    %188 = vmatpush1.msra.mxu0 0.0
    %189 = vmatprep.subr.mxu0 0.0
    %190 = vmatpush1.msra.mxu0 0.0
    %191 = vmatprep.subr.mxu0 0.0
    %192 = vmatpush1.msra.mxu0 0.0
    %193 = vmatprep.subr.mxu0 0.0
    %194 = vmatpush1.msra.mxu0 0.0
    %195 = vmatprep.subr.mxu0 0.0
    %196 = vmatpush1.msra.mxu0 0.0
    %197 = vmatprep.subr.mxu0 0.0
    %198 = vmatpush1.msra.mxu0 0.0
    %199 = vmatprep.subr.mxu0 0.0
    %200 = vmatpush1.msra.mxu0 0.0
    %201 = vmatprep.subr.mxu0 0.0
    %202 = vmatpush1.msra.mxu0 0.0
    %203 = vmatprep.subr.mxu0 0.0
    %204 = vmatpush1.msra.mxu0 0.0
    %205 = vmatprep.subr.mxu0 0.0
    %206 = vmatpush1.msra.mxu0 0.0
    %207 = vmatprep.mubr.f32.mxu0 0.0
    %208 = vmatmul.mubr.f32.gmra.mrb[0].mxu0 %v119
    %v209 = vpop.f32.mrb[0].mxu0
    %v210 = vadd.f32 %v141, %v209
    %v211 = vpop.f32.mrb[0].mxu0
    %212 = vdwg.mxu0
    %v213 = vmax.f32 %v210, 0.0
    %v214 = vld [vmem:[%s5] sm:$0xff]
    %v215 = vld [vmem:[%s5 + $0x8] sm:$0xff]
    %v216 = vld [vmem:[%s5 + $0x10] sm:$0xff]
    %v217 = vld [vmem:[%s5 + $0x18] sm:$0xff]
    %v218 = vld [vmem:[%s5 + $0x20] sm:$0xff]
    %v219 = vld [vmem:[%s5 + $0x28] sm:$0xff]
    %v220 = vld [vmem:[%s5 + $0x30] sm:$0xff]
    %v221 = vld [vmem:[%s5 + $0x38] sm:$0xff]
    %v222 = vld [vmem:[%s6] sm:$0x1]
    %v224 = vlaneseq
    %v225 = vshrl.u32 %v224, 7
    %v226 = vsub.s32 0, %v225
    %v227 = vrot.slane %v222, %v226
    %vm229 = vcmask 523264
    %v231 = vsel %vm229, %v213, 0
    %233 = vmatprep.subr.mxu0 0.0
    %234 = vmatpush1.msra.mxu0 %v214
    %235 = vmatprep.subr.mxu0 0.0
    %236 = vmatpush1.msra.mxu0 %v215
    %237 = vmatprep.subr.mxu0 0.0
    %238 = vmatpush1.msra.mxu0 %v216
    %239 = vmatprep.subr.mxu0 0.0
    %240 = vmatpush1.msra.mxu0 %v217
    %241 = vmatprep.subr.mxu0 0.0
    %242 = vmatpush1.msra.mxu0 %v218
    %243 = vmatprep.subr.mxu0 0.0
    %244 = vmatpush1.msra.mxu0 %v219
    %245 = vmatprep.subr.mxu0 0.0
    %246 = vmatpush1.msra.mxu0 %v220
    %247 = vmatprep.subr.mxu0 0.0
    %248 = vmatpush1.msra.mxu0 %v221
    %249 = vmatprep.subr.mxu0 0.0
    %250 = vmatpush1.msra.mxu0 0.0
    %251 = vmatprep.subr.mxu0 0.0
    %252 = vmatpush1.msra.mxu0 0.0
    %253 = vmatprep.subr.mxu0 0.0
    %254 = vmatpush1.msra.mxu0 0.0
    %255 = vmatprep.subr.mxu0 0.0
    %256 = vmatpush1.msra.mxu0 0.0
    %257 = vmatprep.subr.mxu0 0.0
    %258 = vmatpush1.msra.mxu0 0.0
    %259 = vmatprep.subr.mxu0 0.0
    %260 = vmatpush1.msra.mxu0 0.0
    %261 = vmatprep.subr.mxu0 0.0
    %262 = vmatpush1.msra.mxu0 0.0
    %263 = vmatprep.subr.mxu0 0.0
    %264 = vmatpush1.msra.mxu0 0.0
    %265 = vmatprep.subr.mxu0 0.0
    %266 = vmatpush1.msra.mxu0 0.0
    %267 = vmatprep.subr.mxu0 0.0
    %268 = vmatpush1.msra.mxu0 0.0
    %269 = vmatprep.subr.mxu0 0.0
    %270 = vmatpush1.msra.mxu0 0.0
    %271 = vmatprep.subr.mxu0 0.0
    %272 = vmatpush1.msra.mxu0 0.0
    %273 = vmatprep.subr.mxu0 0.0
    %274 = vmatpush1.msra.mxu0 0.0
    %275 = vmatprep.subr.mxu0 0.0
    %276 = vmatpush1.msra.mxu0 0.0
    %277 = vmatprep.subr.mxu0 0.0
    %278 = vmatpush1.msra.mxu0 0.0
    %279 = vmatprep.subr.mxu0 0.0
    %280 = vmatpush1.msra.mxu0 0.0
    %281 = vmatprep.subr.mxu0 0.0
    %282 = vmatpush1.msra.mxu0 0.0
    %283 = vmatprep.subr.mxu0 0.0
    %284 = vmatpush1.msra.mxu0 0.0
    %285 = vmatprep.subr.mxu0 0.0
    %286 = vmatpush1.msra.mxu0 0.0
    %287 = vmatprep.subr.mxu0 0.0
    %288 = vmatpush1.msra.mxu0 0.0
    %289 = vmatprep.subr.mxu0 0.0
    %290 = vmatpush1.msra.mxu0 0.0
    %291 = vmatprep.subr.mxu0 0.0
    %292 = vmatpush1.msra.mxu0 0.0
    %293 = vmatprep.subr.mxu0 0.0
    %294 = vmatpush1.msra.mxu0 0.0
    %295 = vmatprep.subr.mxu0 0.0
    %296 = vmatpush1.msra.mxu0 0.0
    %297 = vmatprep.mubr.f32.mxu0 0.0
    %298 = vmatmul.mubr.f32.gmra.mrb[0].mxu0 %v231
    %v299 = vpop.f32.mrb[0].mxu0
    %v300 = vadd.f32 %v227, %v299
    %v301 = vpop.f32.mrb[0].mxu0
    %302 = vdwg.mxu0
    %v303 = vmax.f32 %v300, 0.0
    %v304 = vld [vmem:[%s7] sm:$0xff]
    %v305 = vld [vmem:[%s7 + $0x8] sm:$0xff]
    %v306 = vld [vmem:[%s7 + $0x10] sm:$0xff]
    %v307 = vld [vmem:[%s7 + $0x18] sm:$0xff]
    %v308 = vld [vmem:[%s7 + $0x20] sm:$0xff]
    %v309 = vld [vmem:[%s7 + $0x28] sm:$0xff]
    %v310 = vld [vmem:[%s7 + $0x30] sm:$0xff]
    %v311 = vld [vmem:[%s7 + $0x38] sm:$0xff]
    %v312 = vld [vmem:[%s8] sm:$0x1]
    %v314 = vlaneseq
    %v315 = vshrl.u32 %v314, 7
    %v316 = vsub.s32 0, %v315
    %v317 = vrot.slane %v312, %v316
    %v320 = vsel %vm229, %v303, 0
    %322 = vmatprep.subr.mxu0 0.0
    %323 = vmatpush1.msra.mxu0 %v304
    %324 = vmatprep.subr.mxu0 0.0
    %325 = vmatpush1.msra.mxu0 %v305
    %326 = vmatprep.subr.mxu0 0.0
    %327 = vmatpush1.msra.mxu0 %v306
    %328 = vmatprep.subr.mxu0 0.0
    %329 = vmatpush1.msra.mxu0 %v307
    %330 = vmatprep.subr.mxu0 0.0
    %331 = vmatpush1.msra.mxu0 %v308
    %332 = vmatprep.subr.mxu0 0.0
    %333 = vmatpush1.msra.mxu0 %v309
    %334 = vmatprep.subr.mxu0 0.0
    %335 = vmatpush1.msra.mxu0 %v310
    %336 = vmatprep.subr.mxu0 0.0
    %337 = vmatpush1.msra.mxu0 %v311
    %338 = vmatprep.subr.mxu0 0.0
    %339 = vmatpush1.msra.mxu0 0.0
    %340 = vmatprep.subr.mxu0 0.0
    %341 = vmatpush1.msra.mxu0 0.0
    %342 = vmatprep.subr.mxu0 0.0
    %343 = vmatpush1.msra.mxu0 0.0
    %344 = vmatprep.subr.mxu0 0.0
    %345 = vmatpush1.msra.mxu0 0.0
    %346 = vmatprep.subr.mxu0 0.0
    %347 = vmatpush1.msra.mxu0 0.0
    %348 = vmatprep.subr.mxu0 0.0
    %349 = vmatpush1.msra.mxu0 0.0
    %350 = vmatprep.subr.mxu0 0.0
    %351 = vmatpush1.msra.mxu0 0.0
    %352 = vmatprep.subr.mxu0 0.0
    %353 = vmatpush1.msra.mxu0 0.0
    %354 = vmatprep.subr.mxu0 0.0
    %355 = vmatpush1.msra.mxu0 0.0
    %356 = vmatprep.subr.mxu0 0.0
    %357 = vmatpush1.msra.mxu0 0.0
    %358 = vmatprep.subr.mxu0 0.0
    %359 = vmatpush1.msra.mxu0 0.0
    %360 = vmatprep.subr.mxu0 0.0
    %361 = vmatpush1.msra.mxu0 0.0
    %362 = vmatprep.subr.mxu0 0.0
    %363 = vmatpush1.msra.mxu0 0.0
    %364 = vmatprep.subr.mxu0 0.0
    %365 = vmatpush1.msra.mxu0 0.0
    %366 = vmatprep.subr.mxu0 0.0
    %367 = vmatpush1.msra.mxu0 0.0
    %368 = vmatprep.subr.mxu0 0.0
    %369 = vmatpush1.msra.mxu0 0.0
    %370 = vmatprep.subr.mxu0 0.0
    %371 = vmatpush1.msra.mxu0 0.0
    %372 = vmatprep.subr.mxu0 0.0
    %373 = vmatpush1.msra.mxu0 0.0
    %374 = vmatprep.subr.mxu0 0.0
    %375 = vmatpush1.msra.mxu0 0.0
    %376 = vmatprep.subr.mxu0 0.0
    %377 = vmatpush1.msra.mxu0 0.0
    %378 = vmatprep.subr.mxu0 0.0
    %379 = vmatpush1.msra.mxu0 0.0
    %380 = vmatprep.subr.mxu0 0.0
    %381 = vmatpush1.msra.mxu0 0.0
    %382 = vmatprep.subr.mxu0 0.0
    %383 = vmatpush1.msra.mxu0 0.0
    %384 = vmatprep.subr.mxu0 0.0
    %385 = vmatpush1.msra.mxu0 0.0
    %386 = vmatprep.mubr.f32.mxu0 0.0
    %387 = vmatmul.mubr.f32.gmra.mrb[0].mxu0 %v320
    %v388 = vpop.f32.mrb[0].mxu0
    %v389 = vadd.f32 %v317, %v388
    %v390 = vpop.f32.mrb[0].mxu0
    %391 = vdwg.mxu0
    %392 = vst.msk [vmem:[#allocation2] sm:$0xff] %vm229, %v213
    %393 = vrot.lane.b32.xlu0 %v303, 32
    %v394 = vpop.permute.xlu0 %393
    %vm396 = vcmask 785920
    %397 = vst.msk [vmem:[#allocation2] sm:$0xff] %vm396, %v394
    %399 = vrot.lane.b32.xlu0 %v389, 96
    %v400 = vpop.permute.xlu0 %399
    %vm402 = vcmask 884480
    %403 = vst.msk [vmem:[#allocation2] sm:$0xff] %vm402, %v400
    %vm404 = vcmask 1048416
    %405 = vst.msk [vmem:[#allocation2] sm:$0xff] %vm404, 0.0
    // Predicated region
    $region38: #{tpu_custom_call.1} parent=1 // pred_check
      _
    $region39: #{tpu_custom_call.1} parent=1 // pred_check_branch
      %407 = sbr.rel (0) target = $region41
    $region40: #{tpu_custom_call.1} parent=1 // pred_region
      %s409 = ssub.s32 128, 128
      %410 = vsyncadd [#allocation3], %s409
      %s412 = sshll.u32 [#allocation2], 4
      %s413 = int_to_ptr.vmem [resolvable:$true] %s412
      %415 = dma.vmem_to_hbm [thread:$0]  %s413, 128, %s9, [#allocation3]
    $region41: #{tpu_custom_call.1} parent=1 // pred_fallthru
      _
    // Predicated region
    $region42: #{tpu_custom_call.1} parent=1 // pred_check
      _
    $region43: #{tpu_custom_call.1} parent=1 // pred_check_branch
      %417 = sbr.rel (0) target = $region45
    $region44: #{tpu_custom_call.1} parent=1 // pred_region
      %418 = dma.done [#allocation3], 128
    $region45: #{tpu_custom_call.1} parent=1 // pred_fallthru
      _
    %419 = vsyncpa [#allocation3], 1

</llo_original>
